<compile_context>
chip_gen: v6e
topology: v6e:2x2x1
jax: 0.10.0
libtpu: 0.0.40
codegen_flags: <defaults>
</compile_context>

<pallas_src>
import functools

import jax
import jax.numpy as jnp
from jax.experimental import pallas as pl
from jax.experimental.pallas import tpu as pltpu

LANE = 128


def _round_up(a: int, b: int) -> int:
    return (a + b - 1) // b * b


def _resnet_kernel(nblocks,
                   x_ref, w0_ref, b0_ref,
                   wa_ref, ba_ref, wb_ref, bb_ref,
                   wl_ref, o_ref):
    """One batch tile of the lane-packed residual MLP.

    Matmul operands are bf16 (MXU-native) with f32 accumulation; bias adds are
    f32; tanh runs in bf16 (EUP bf16 path on v6e/v7x); the residual carry `h`
    stays f32.
    """
    bf16, f32 = jnp.bfloat16, jnp.float32

    pre = (jnp.dot(x_ref[...], w0_ref[...], preferred_element_type=f32)
           + b0_ref[...])
    h = jnp.tanh(pre.astype(bf16)).astype(f32)

    # Residual blocks: small static count (2 here) -> unrolled; serially
    # dependent anyway.
    # TODO(synk): switch to lax.fori_loop(..., unroll=True) if nblocks grows
    # beyond ~4 (bounds live ranges / spill pressure at large tiles).
    for i in range(nblocks):
        t = jnp.tanh(
            (jnp.dot(h.astype(bf16), wa_ref[i], preferred_element_type=f32)
             + ba_ref[i]).astype(bf16))
        t = jnp.tanh(
            (jnp.dot(t, wb_ref[i], preferred_element_type=f32)
             + bb_ref[i]).astype(bf16))
        h = t.astype(f32) + h

    # Last layer (no bias).  Output slab is lane-dense (last dim = 128) and bf16
    # to keep the HBM writeback small and the vst unmasked.
    o_ref[...] = jnp.dot(h.astype(bf16), wl_ref[...],
                         preferred_element_type=f32).astype(o_ref.dtype)


def resnet_forward(x, params, *, tile_rows=512):
    """x: [n, d_in] f32.  params: dict from init_params.  Returns [n, d_out] f32.

    `tile_rows` counts PACKED rows (pack samples per row), so the default 512
    corresponds to 2048 samples per grid step.
    """
    w0, b0 = params["w0"], params["b0"]
    wa, ba = params["wa"], params["ba"]
    wb, bb = params["wb"], params["bb"]
    wl = params["wl"]

    n, d_in = x.shape
    hidden = w0.shape[1]
    d_out = wl.shape[1]
    nblocks = wa.shape[0]

    # ---- lane-packing geometry ------------------------------------------------
    # Pack `pack` samples per vreg row so all 128 lanes carry real data
    # (hidden=32 -> pack=4, pack*hidden = 128 exactly: zero padding disappears).
    pack = max(1, LANE // hidden) if hidden <= LANE else 1
    hp = _round_up(pack * hidden, LANE)     # packed hidden lane width
    xw = pack * d_in                        # packed input width
    op = _round_up(pack * d_out, LANE)      # packed (lane-dense) output width

    n_pk = _round_up(n, pack) // pack       # packed rows holding real samples
    # Large tiles amortize the ~0.35us/grid-step overhead, but cap the tile so
    # the grid has >=2 steps when there is enough data (v7x has 2 TensorCores
    # and shards the "parallel" batch axis across them).
    half_rows = _round_up(max(n_pk // 2, 1), 16)
    tile_r = max(16, min(int(tile_rows), half_rows))
    tile_r = _round_up(tile_r, 16)          # bf16 sublane packing
    n_pk_pad = _round_up(n_pk, tile_r)

    f32, bf16 = jnp.float32, jnp.bfloat16

    # x: [n, d_in] -> packed [n_pk_pad, pack*d_in] bf16 (packed in the wrapper so
    # the per-tile x DMA is a single contiguous rectangular copy).
    x_rows = jnp.zeros((n_pk_pad * pack, d_in), f32).at[:n].set(x)
    x_p = x_rows.reshape(n_pk_pad, xw).astype(bf16)

    # Block-diagonal weights / lane-tiled biases.
    # Correctness of padded lanes relies on: (a) off-diagonal and padding weight
    # entries are exactly 0, and (b) padding bias lanes are exactly 0, so padded
    # pre-activations are 0, tanh(0) = 0 keeps them 0, and the residual carry
    # never contaminates real lanes.  Do NOT pad with non-zero values.
    def bdiag(w, rows, cols, dt):
        r, c = w.shape
        out = jnp.zeros((rows, cols), dt)
        wd = w.astype(dt)
        for k in range(pack):
            out = out.at[k * r:(k + 1) * r, k * c:(k + 1) * c].set(wd)
        return out

    def btile(b, cols):
        t = jnp.tile(b.astype(f32), (1, pack))
        return jnp.zeros((1, cols), f32).at[:, :t.shape[1]].set(t)

    w0_p = bdiag(w0, xw, hp, bf16)
    b0_p = btile(b0, hp)
    wl_p = bdiag(wl, hp, op, bf16)

    nb_eff = max(nblocks, 1)                # avoid zero-sized operands if nblocks==0

    def bdiag3(w3):
        out = jnp.zeros((nb_eff, hp, hp), bf16)
        if nblocks:
            r, c = w3.shape[1], w3.shape[2]
            wd = w3.astype(bf16)
            for k in range(pack):
                out = out.at[:, k * r:(k + 1) * r, k * c:(k + 1) * c].set(wd)
        return out

    def btile3(b3):
        out = jnp.zeros((nb_eff, 1, hp), f32)
        if nblocks:
            t = jnp.tile(b3.astype(f32), (1, 1, pack))
            out = out.at[:, :, :t.shape[2]].set(t)
        return out

    wa_p, ba_p = bdiag3(wa), btile3(ba)
    wb_p, bb_p = bdiag3(wb), btile3(bb)

    grid = (n_pk_pad // tile_r,)
    const2 = lambda i: (0, 0)
    const3 = lambda i: (0, 0, 0)

    in_specs = [
        pl.BlockSpec((tile_r, xw), lambda i: (i, 0)),    # x   (pipelined per tile)
        pl.BlockSpec((xw, hp), const2),                  # w0  (VMEM-resident)
        pl.BlockSpec((1, hp), const2),                   # b0
        pl.BlockSpec((nb_eff, hp, hp), const3),          # wa
        pl.BlockSpec((nb_eff, 1, hp), const3),           # ba
        pl.BlockSpec((nb_eff, hp, hp), const3),          # wb
        pl.BlockSpec((nb_eff, 1, hp), const3),           # bb
        pl.BlockSpec((hp, op), const2),                  # wl
    ]
    out_spec = pl.BlockSpec((tile_r, op), lambda i: (i, 0))

    param_bytes = (int(w0_p.size + wa_p.size + wb_p.size + wl_p.size) * 2
                   + int(b0_p.size + ba_p.size + bb_p.size) * 4)
    cost = pl.CostEstimate(
        flops=int(2 * n_pk_pad * (xw * hp + nblocks * 2 * hp * hp + hp * op)),
        transcendentals=int(n_pk_pad * hp * (1 + 2 * nblocks)),
        bytes_accessed=int(x_p.size) * 2 + int(n_pk_pad * op) * 2 + param_bytes,
    )

    out = pl.pallas_call(
        functools.partial(_resnet_kernel, nblocks),
        out_shape=jax.ShapeDtypeStruct((n_pk_pad, op), bf16),
        grid=grid,
        in_specs=in_specs,
        out_specs=out_spec,
        compiler_params=pltpu.CompilerParams(
            dimension_semantics=("parallel",)),
        cost_estimate=cost,
    )(x_p, w0_p, b0_p, wa_p, ba_p, wb_p, bb_p, wl_p)

    # Un-pack: row r, lanes [k*d_out, (k+1)*d_out) hold sample r*pack + k.
    out = out[:, :pack * d_out].reshape(n_pk_pad * pack, d_out)[:n]
    return out.astype(jnp.float32)


def init_params(key, mlp_layers):
    """Deterministic synthetic init; weight shapes match the PyTorch module,
    but stored transposed ([in, out]) for the kernel."""
    d_in, hidden = mlp_layers[0], mlp_layers[1]
    d_out = mlp_layers[-1]
    nblocks = len(mlp_layers) - 3  # blocks i = 1 .. len-3
    # residual blocks require equal hidden widths (same constraint as the torch code)
    assert all(h == hidden for h in mlp_layers[1:-1])

    ks = jax.random.split(key, 6)

    def u(k, shape, fan_in):
        bound = 1.0 / jnp.sqrt(fan_in)
        return jax.random.uniform(k, shape, jnp.float32, -bound, bound)

    params = {
        "w0": u(ks[0], (d_in, hidden), d_in),
        "b0": u(ks[1], (1, hidden), d_in),
        "wa": u(ks[2], (max(nblocks, 1), hidden, hidden), hidden)[:nblocks],
        "ba": u(ks[3], (max(nblocks, 1), 1, hidden), hidden)[:nblocks],
        "wb": u(ks[4], (max(nblocks, 1), hidden, hidden), hidden)[:nblocks],
        "bb": u(ks[5], (max(nblocks, 1), 1, hidden), hidden)[:nblocks],
        "wl": u(jax.random.fold_in(key, 7), (hidden, d_out), hidden),
    }
    return params


def resnet_reference(x, params):
    """Pure-JAX f32 reference of the same forward for a correctness check."""
    h = jnp.tanh(x @ params["w0"] + params["b0"])
    for i in range(params["wa"].shape[0]):
        t = jnp.tanh(h @ params["wa"][i] + params["ba"][i])
        t = jnp.tanh(t @ params["wb"][i] + params["bb"][i])
        h = t + h
    return h @ params["wl"]


if __name__ == "__main__":
    # Elliptic-baseline-like config: 20-d input, scalar output, 2 residual blocks.
    mlp_layers = [20, 32, 32, 32, 1]
    batch = 200  # not a multiple of pack*tile -> exercises row padding

    key = jax.random.PRNGKey(0)
    kx, kp = jax.random.split(key)
    x = jax.random.normal(kx, (batch, mlp_layers[0]), dtype=jnp.float32)
    params = init_params(kp, mlp_layers)

    # Small tile so the test exercises a multi-step (>=2) grid; production use
    # keeps the default tile_rows=512 (= 2048 samples per grid step).
    out = resnet_forward(x, params, tile_rows=16)
    out = jax.block_until_ready(out)

    ref = resnet_reference(x, params)
    assert out.shape == (batch, mlp_layers[-1])
    # bf16 MXU operands + bf16 tanh with f32 accumulation / f32 residual carry
    # -> relaxed tolerance vs the pure-f32 reference.
    err = float(jnp.max(jnp.abs(out - ref)))
    assert jnp.allclose(out, ref, atol=5e-2, rtol=5e-2), err

    print("KERNEL_OK")
</pallas_src>

<mosaic_0001>
module attributes {stable_mosaic.version = 11 : i64} {
  func.func @_resnet_kernel(%arg0: i32, %arg1: memref<16x80xbf16, #tpu.memory_space<vmem>>, %arg2: memref<80x128xbf16, #tpu.memory_space<vmem>>, %arg3: memref<1x128xf32, #tpu.memory_space<vmem>>, %arg4: memref<2x128x128xbf16, #tpu.memory_space<vmem>>, %arg5: memref<2x1x128xf32, #tpu.memory_space<vmem>>, %arg6: memref<2x128x128xbf16, #tpu.memory_space<vmem>>, %arg7: memref<2x1x128xf32, #tpu.memory_space<vmem>>, %arg8: memref<128x128xbf16, #tpu.memory_space<vmem>>, %arg9: memref<16x128xbf16, #tpu.memory_space<vmem>>) attributes {dimension_semantics = [#tpu.dimension_semantics<parallel>], iteration_bounds = array<i64: 4>, scalar_prefetch = 0 : i64, scratch_operands = 0 : i64, tpu.core_type = #tpu.core_type<tc>, window_params = [{transform_indices = @transform_0, window_bounds = array<i64: 16, 80>}, {pipeline_mode = #tpu.pipeline_mode<synchronous>, transform_indices = @transform_1, window_bounds = array<i64: 80, 128>}, {pipeline_mode = #tpu.pipeline_mode<synchronous>, transform_indices = @transform_2, window_bounds = array<i64: 1, 128>}, {pipeline_mode = #tpu.pipeline_mode<synchronous>, transform_indices = @transform_3, window_bounds = array<i64: 2, 128, 128>}, {pipeline_mode = #tpu.pipeline_mode<synchronous>, transform_indices = @transform_4, window_bounds = array<i64: 2, 1, 128>}, {pipeline_mode = #tpu.pipeline_mode<synchronous>, transform_indices = @transform_5, window_bounds = array<i64: 2, 128, 128>}, {pipeline_mode = #tpu.pipeline_mode<synchronous>, transform_indices = @transform_6, window_bounds = array<i64: 2, 1, 128>}, {pipeline_mode = #tpu.pipeline_mode<synchronous>, transform_indices = @transform_7, window_bounds = array<i64: 128, 128>}, {transform_indices = @transform_8, window_bounds = array<i64: 16, 128>}]} {
    %c0 = arith.constant 0 : index
    %c0_0 = arith.constant 0 : index
    %0 = vector.load %arg1[%c0, %c0_0] : memref<16x80xbf16, #tpu.memory_space<vmem>>, vector<16x80xbf16>
    %c0_1 = arith.constant 0 : index
    %c0_2 = arith.constant 0 : index
    %1 = vector.load %arg2[%c0_1, %c0_2] : memref<80x128xbf16, #tpu.memory_space<vmem>>, vector<80x128xbf16>
    %cst = arith.constant dense<0.000000e+00> : vector<16x128xf32>
    %2 = tpu.matmul %0, %1, %cst {dimension_numbers = #tpu.dot_dimension_numbers<[1], [0], [0], [1], [0, 0, 1, 1], [], []>} : vector<16x80xbf16>, vector<80x128xbf16>, vector<16x128xf32> -> vector<16x128xf32>
    %c0_3 = arith.constant 0 : index
    %c0_4 = arith.constant 0 : index
    %3 = vector.load %arg3[%c0_3, %c0_4] : memref<1x128xf32, #tpu.memory_space<vmem>>, vector<1x128xf32>
    %4 = vector.broadcast %3 : vector<1x128xf32> to vector<16x128xf32>
    %5 = arith.addf %2, %4 : vector<16x128xf32>
    %6 = arith.truncf %5 : vector<16x128xf32> to vector<16x128xbf16>
    %7 = math.tanh %6 : vector<16x128xbf16>
    %8 = arith.extf %7 : vector<16x128xbf16> to vector<16x128xf32>
    %9 = arith.truncf %8 : vector<16x128xf32> to vector<16x128xbf16>
    %c0_5 = arith.constant 0 : index
    %c0_6 = arith.constant 0 : index
    %c0_7 = arith.constant 0 : index
    %10 = vector.load %arg4[%c0_5, %c0_6, %c0_7] : memref<2x128x128xbf16, #tpu.memory_space<vmem>>, vector<1x128x128xbf16>
    %11 = vector.shape_cast %10 : vector<1x128x128xbf16> to vector<128x128xbf16>
    %cst_8 = arith.constant dense<0.000000e+00> : vector<16x128xf32>
    %12 = tpu.matmul %9, %11, %cst_8 {dimension_numbers = #tpu.dot_dimension_numbers<[1], [0], [0], [1], [0, 0, 1, 1], [], []>} : vector<16x128xbf16>, vector<128x128xbf16>, vector<16x128xf32> -> vector<16x128xf32>
    %c0_9 = arith.constant 0 : index
    %c0_10 = arith.constant 0 : index
    %c0_11 = arith.constant 0 : index
    %13 = vector.load %arg5[%c0_9, %c0_10, %c0_11] : memref<2x1x128xf32, #tpu.memory_space<vmem>>, vector<1x1x128xf32>
    %14 = vector.shape_cast %13 : vector<1x1x128xf32> to vector<1x128xf32>
    %15 = vector.broadcast %14 : vector<1x128xf32> to vector<16x128xf32>
    %16 = arith.addf %12, %15 : vector<16x128xf32>
    %17 = arith.truncf %16 : vector<16x128xf32> to vector<16x128xbf16>
    %18 = math.tanh %17 : vector<16x128xbf16>
    %c0_12 = arith.constant 0 : index
    %c0_13 = arith.constant 0 : index
    %c0_14 = arith.constant 0 : index
    %19 = vector.load %arg6[%c0_12, %c0_13, %c0_14] : memref<2x128x128xbf16, #tpu.memory_space<vmem>>, vector<1x128x128xbf16>
    %20 = vector.shape_cast %19 : vector<1x128x128xbf16> to vector<128x128xbf16>
    %cst_15 = arith.constant dense<0.000000e+00> : vector<16x128xf32>
    %21 = tpu.matmul %18, %20, %cst_15 {dimension_numbers = #tpu.dot_dimension_numbers<[1], [0], [0], [1], [0, 0, 1, 1], [], []>} : vector<16x128xbf16>, vector<128x128xbf16>, vector<16x128xf32> -> vector<16x128xf32>
    %c0_16 = arith.constant 0 : index
    %c0_17 = arith.constant 0 : index
    %c0_18 = arith.constant 0 : index
    %22 = vector.load %arg7[%c0_16, %c0_17, %c0_18] : memref<2x1x128xf32, #tpu.memory_space<vmem>>, vector<1x1x128xf32>
    %23 = vector.shape_cast %22 : vector<1x1x128xf32> to vector<1x128xf32>
    %24 = vector.broadcast %23 : vector<1x128xf32> to vector<16x128xf32>
    %25 = arith.addf %21, %24 : vector<16x128xf32>
    %26 = arith.truncf %25 : vector<16x128xf32> to vector<16x128xbf16>
    %27 = math.tanh %26 : vector<16x128xbf16>
    %28 = arith.extf %27 : vector<16x128xbf16> to vector<16x128xf32>
    %29 = arith.addf %28, %8 : vector<16x128xf32>
    %30 = arith.truncf %29 : vector<16x128xf32> to vector<16x128xbf16>
    %c1 = arith.constant 1 : index
    %c0_19 = arith.constant 0 : index
    %c0_20 = arith.constant 0 : index
    %31 = vector.load %arg4[%c1, %c0_19, %c0_20] : memref<2x128x128xbf16, #tpu.memory_space<vmem>>, vector<1x128x128xbf16>
    %32 = vector.shape_cast %31 : vector<1x128x128xbf16> to vector<128x128xbf16>
    %cst_21 = arith.constant dense<0.000000e+00> : vector<16x128xf32>
    %33 = tpu.matmul %30, %32, %cst_21 {dimension_numbers = #tpu.dot_dimension_numbers<[1], [0], [0], [1], [0, 0, 1, 1], [], []>} : vector<16x128xbf16>, vector<128x128xbf16>, vector<16x128xf32> -> vector<16x128xf32>
    %c1_22 = arith.constant 1 : index
    %c0_23 = arith.constant 0 : index
    %c0_24 = arith.constant 0 : index
    %34 = vector.load %arg5[%c1_22, %c0_23, %c0_24] : memref<2x1x128xf32, #tpu.memory_space<vmem>>, vector<1x1x128xf32>
    %35 = vector.shape_cast %34 : vector<1x1x128xf32> to vector<1x128xf32>
    %36 = vector.broadcast %35 : vector<1x128xf32> to vector<16x128xf32>
    %37 = arith.addf %33, %36 : vector<16x128xf32>
    %38 = arith.truncf %37 : vector<16x128xf32> to vector<16x128xbf16>
    %39 = math.tanh %38 : vector<16x128xbf16>
    %c1_25 = arith.constant 1 : index
    %c0_26 = arith.constant 0 : index
    %c0_27 = arith.constant 0 : index
    %40 = vector.load %arg6[%c1_25, %c0_26, %c0_27] : memref<2x128x128xbf16, #tpu.memory_space<vmem>>, vector<1x128x128xbf16>
    %41 = vector.shape_cast %40 : vector<1x128x128xbf16> to vector<128x128xbf16>
    %cst_28 = arith.constant dense<0.000000e+00> : vector<16x128xf32>
    %42 = tpu.matmul %39, %41, %cst_28 {dimension_numbers = #tpu.dot_dimension_numbers<[1], [0], [0], [1], [0, 0, 1, 1], [], []>} : vector<16x128xbf16>, vector<128x128xbf16>, vector<16x128xf32> -> vector<16x128xf32>
    %c1_29 = arith.constant 1 : index
    %c0_30 = arith.constant 0 : index
    %c0_31 = arith.constant 0 : index
    %43 = vector.load %arg7[%c1_29, %c0_30, %c0_31] : memref<2x1x128xf32, #tpu.memory_space<vmem>>, vector<1x1x128xf32>
    %44 = vector.shape_cast %43 : vector<1x1x128xf32> to vector<1x128xf32>
    %45 = vector.broadcast %44 : vector<1x128xf32> to vector<16x128xf32>
    %46 = arith.addf %42, %45 : vector<16x128xf32>
    %47 = arith.truncf %46 : vector<16x128xf32> to vector<16x128xbf16>
    %48 = math.tanh %47 : vector<16x128xbf16>
    %49 = arith.extf %48 : vector<16x128xbf16> to vector<16x128xf32>
    %50 = arith.addf %49, %29 : vector<16x128xf32>
    %51 = arith.truncf %50 : vector<16x128xf32> to vector<16x128xbf16>
    %c0_32 = arith.constant 0 : index
    %c0_33 = arith.constant 0 : index
    %52 = vector.load %arg8[%c0_32, %c0_33] : memref<128x128xbf16, #tpu.memory_space<vmem>>, vector<128x128xbf16>
    %cst_34 = arith.constant dense<0.000000e+00> : vector<16x128xf32>
    %53 = tpu.matmul %51, %52, %cst_34 {dimension_numbers = #tpu.dot_dimension_numbers<[1], [0], [0], [1], [0, 0, 1, 1], [], []>} : vector<16x128xbf16>, vector<128x128xbf16>, vector<16x128xf32> -> vector<16x128xf32>
    %54 = arith.truncf %53 : vector<16x128xf32> to vector<16x128xbf16>
    %c0_35 = arith.constant 0 : index
    %c0_36 = arith.constant 0 : index
    %55 = vector.load %arg9[%c0_35, %c0_36] : memref<16x128xbf16, #tpu.memory_space<vmem>>, vector<16x128xbf16>
    tpu.vector_store %arg9[%c0_35, %c0_36], %54 {strides = array<i32>} : memref<16x128xbf16, #tpu.memory_space<vmem>>, vector<16x128xbf16>,
    return
  }
  func.func @transform_0(%arg0: i32) -> (i32, i32) {
    %c0_i32 = arith.constant 0 : i32
    %c0_i32_0 = arith.constant 0 : i32
    return %arg0, %c0_i32 : i32, i32
  }
  func.func @transform_1(%arg0: i32) -> (i32, i32) {
    %c0_i32 = arith.constant 0 : i32
    %c0_i32_0 = arith.constant 0 : i32
    %c0_i32_1 = arith.constant 0 : i32
    return %c0_i32, %c0_i32_0 : i32, i32
  }
  func.func @transform_2(%arg0: i32) -> (i32, i32) {
    %c0_i32 = arith.constant 0 : i32
    %c0_i32_0 = arith.constant 0 : i32
    %c0_i32_1 = arith.constant 0 : i32
    return %c0_i32, %c0_i32_0 : i32, i32
  }
  func.func @transform_3(%arg0: i32) -> (i32, i32, i32) {
    %c0_i32 = arith.constant 0 : i32
    %c0_i32_0 = arith.constant 0 : i32
    %c0_i32_1 = arith.constant 0 : i32
    %c0_i32_2 = arith.constant 0 : i32
    return %c0_i32, %c0_i32_0, %c0_i32_1 : i32, i32, i32
  }
  func.func @transform_4(%arg0: i32) -> (i32, i32, i32) {
    %c0_i32 = arith.constant 0 : i32
    %c0_i32_0 = arith.constant 0 : i32
    %c0_i32_1 = arith.constant 0 : i32
    %c0_i32_2 = arith.constant 0 : i32
    return %c0_i32, %c0_i32_0, %c0_i32_1 : i32, i32, i32
  }
  func.func @transform_5(%arg0: i32) -> (i32, i32, i32) {
    %c0_i32 = arith.constant 0 : i32
    %c0_i32_0 = arith.constant 0 : i32
    %c0_i32_1 = arith.constant 0 : i32
    %c0_i32_2 = arith.constant 0 : i32
    return %c0_i32, %c0_i32_0, %c0_i32_1 : i32, i32, i32
  }
  func.func @transform_6(%arg0: i32) -> (i32, i32, i32) {
    %c0_i32 = arith.constant 0 : i32
    %c0_i32_0 = arith.constant 0 : i32
    %c0_i32_1 = arith.constant 0 : i32
    %c0_i32_2 = arith.constant 0 : i32
    return %c0_i32, %c0_i32_0, %c0_i32_1 : i32, i32, i32
  }
  func.func @transform_7(%arg0: i32) -> (i32, i32) {
    %c0_i32 = arith.constant 0 : i32
    %c0_i32_0 = arith.constant 0 : i32
    %c0_i32_1 = arith.constant 0 : i32
    return %c0_i32, %c0_i32_0 : i32, i32
  }
  func.func @transform_8(%arg0: i32) -> (i32, i32) {
    %c0_i32 = arith.constant 0 : i32
    %c0_i32_0 = arith.constant 0 : i32
    return %arg0, %c0_i32 : i32, i32
  }
}

</mosaic_0001>

<llo_original>
// kernel: tpu_custom_call.1
$region0: #{tpu_custom_call.1}
  #allocation0 [shape = 'u32[]', space=smem, size = 0x4, offset = 0x4, fixed_abs, tag = 'smem constant byte address 0x4 - core index']
  #allocation1 [shape = 'u32[144,128]{1,0:T(1,128)}', space=vmem, size = 0x12000, scoped, tag = 'internal scratch']
  %s0 = inlined_call_operand.hbm [shape: bf16[64,80], index: 0, kind: input, shape index: {}]
  %s1 = inlined_call_operand.hbm [shape: bf16[80,128], index: 1, kind: input, shape index: {}]
  %s2 = inlined_call_operand.vmem [shape: f32[1,128], index: 2, kind: input, shape index: {}]
  %s3 = inlined_call_operand.hbm [shape: bf16[2,128,128], index: 3, kind: input, shape index: {}]
  %s4 = inlined_call_operand.vmem [shape: f32[2,1,128], index: 4, kind: input, shape index: {}]
  %s5 = inlined_call_operand.hbm [shape: bf16[2,128,128], index: 5, kind: input, shape index: {}]
  %s6 = inlined_call_operand.vmem [shape: f32[2,1,128], index: 6, kind: input, shape index: {}]
  %s7 = inlined_call_operand.hbm [shape: bf16[128,128], index: 7, kind: input, shape index: {}]
  %s8 = inlined_call_operand.hbm [shape: bf16[64,128], index: 8, kind: output, shape index: {}]
  %s9 = sld [smem:[#allocation0]]
  $region85: #{tpu_custom_call.1} parent=0
    _
  %s11 = ssub.s32 1, %s9
  %s12 = scalar_select 0, %s11, %s9
  $region1: #{tpu_custom_call.1} parent=0
    #allocation2 [shape = 'u8[8192]{0}', space=vmem, size = 0x2000, scoped, tag = 'input window, operand 0']
    #allocation3 [shape = 's32[2]{0}', space=sflag, size = 0x8, scoped, tag = 'scoped memory for tpu_custom_call.1']
    #allocation4 [shape = 's32[2]{0}', space=sflag, size = 0x8, scoped, tag = 'scoped memory for tpu_custom_call.1']
    #allocation5 [shape = 'u8[20480]{0}', space=vmem, size = 0x5000, scoped, tag = 'input window, operand 1, single buffered']
    #allocation6 [shape = 's32[1]{0}', space=sflag, size = 0x4, scoped, tag = 'scoped memory for tpu_custom_call.1']
    #allocation7 [shape = 'u8[65536]{0}', space=vmem, size = 0x10000, scoped, tag = 'input window, operand 3, single buffered']
    #allocation8 [shape = 'u8[65536]{0}', space=vmem, size = 0x10000, scoped, tag = 'input window, operand 5, single buffered']
    #allocation9 [shape = 's32[1]{0}', space=sflag, size = 0x4, scoped, tag = 'scoped memory for tpu_custom_call.1']
    #allocation10 [shape = 'u8[32768]{0}', space=vmem, size = 0x8000, scoped, tag = 'input window, operand 7, single buffered']
    #allocation11 [shape = 'u8[8192]{0}', space=vmem, size = 0x2000, scoped, tag = 'output window, operand 0']
    %13 = vsyncpa [#allocation3], 0
    %s14 = scalar_lea.sflag [#allocation3], 1
    %15 = vsyncpa %s14, 0
    %16 = vsyncpa [#allocation6], 0
    %17 = vsyncpa [#allocation9], 0
    %18 = vsyncpa [#allocation4], 0
    %s19 = scalar_lea.sflag [#allocation4], 1
    %20 = vsyncpa %s19, 0
    loop: start=0, step=1, limit=6
    $region2: #{tpu_custom_call.1} parent=1 // loop_pre_header
      _
    $region3: #{tpu_custom_call.1} parent=1 // loop_header
      %s22 = sphi 0, %s26
      %p23 = scmp.ge.s32.totalorder %s22, 6
      %s32 = sphi 0, %s34
      %s35 = sphi 0, %s32
      %s36 = sphi 0, %s35
      %s52 = sphi 0, %s36
      %s56 = sphi 0, %s56
      %s58 = sphi 0, %s56
      %s59 = sphi 0, %s58
      %s73 = sphi 0, %s59
      %s77 = sphi 0, %s77
      %s79 = sphi 0, %s77
      %s80 = sphi 0, %s79
      %s94 = sphi 0, %s80
      %s98 = sphi 0, %s98
      %s100 = sphi 0, %s98
      %s101 = sphi 0, %s100
      %s115 = sphi 0, %s101
      %s119 = sphi 0, %s119
      %s121 = sphi 0, %s119
      %s122 = sphi 0, %s121
      %s136 = sphi 0, %s122
      %s140 = sphi 0, %s140
      %s142 = sphi 0, %s140
      %s143 = sphi 0, %s142
      %s157 = sphi 0, %s143
      %s161 = sphi 0, %s161
      %s163 = sphi 0, %s161
      %s164 = sphi 0, %s163
      %s178 = sphi 0, %s164
      %s182 = sphi 0, %s182
      %s184 = sphi 0, %s182
      %s185 = sphi 0, %s184
      %s199 = sphi 0, %s185
      %s205 = sphi 0, %s207
      %s208 = sphi 0, %s205
      %s209 = sphi 0, %s208
      %s225 = sphi 0, %s209
    $region4: #{tpu_custom_call.1} parent=1 // loop_header_branch
      %25 = sbr.rel (%p23) target = $region8
    $region5: #{tpu_custom_call.1} parent=1 // loop_body
      %s27 = ssub.s32 %s22, 1
      %s28 = ssub.s32 %s22, 2
      %s29 = sadd.s32 %s22, 1
      %s30 = ssub.s32 %s22, %s29
      %p31 = scmp.eq.s32.totalorder %s30, 0
      %s33 = sadd.s32 %s32, 1
      %s34 = scalar_select %p31, %s32, %s33
      %p37 = pneg %p31
      %p38 = scmp.eq.s32.totalorder %s22, 3
      %p39 = por %p37, %p38
      %p40 = scmp.ne.s32.totalorder %s32, %s35
      %p41 = scmp.eq.s32.totalorder %s22, 0
      %p42 = por %p40, %p41
      %p43 = scmp.ne.s32.totalorder %s32, %s35
      %p44 = scmp.eq.s32.totalorder %s27, 3
      %p45 = por %p43, %p44
      %p46 = scmp.ne.s32.totalorder %s35, %s36
      %p47 = scmp.eq.s32.totalorder %s27, 0
      %p48 = por %p46, %p47
      %p49 = scmp.ne.s32.totalorder %s35, %s36
      %p50 = scmp.eq.s32.totalorder %s28, 3
      %p51 = por %p49, %p50
      %p53 = scmp.ne.s32.totalorder %s36, %s52
      %p54 = scmp.eq.s32.totalorder %s28, 0
      %p55 = por %p53, %p54
      %s57 = sadd.s32 %s56, 1
      %p60 = scmp.eq.s32.totalorder %s22, 3
      %p61 = scmp.ne.s32.totalorder %s56, %s58
      %p62 = scmp.eq.s32.totalorder %s22, 0
      %p63 = por %p61, %p62
      %p64 = scmp.ne.s32.totalorder %s56, %s58
      %p65 = scmp.eq.s32.totalorder %s27, 3
      %p66 = por %p64, %p65
      %p67 = scmp.ne.s32.totalorder %s58, %s59
      %p68 = scmp.eq.s32.totalorder %s27, 0
      %p69 = por %p67, %p68
      %p70 = scmp.ne.s32.totalorder %s58, %s59
      %p71 = scmp.eq.s32.totalorder %s28, 3
      %p72 = por %p70, %p71
      %p74 = scmp.ne.s32.totalorder %s59, %s73
      %p75 = scmp.eq.s32.totalorder %s28, 0
      %p76 = por %p74, %p75
      %s78 = sadd.s32 %s77, 1
      %p81 = scmp.eq.s32.totalorder %s22, 3
      %p82 = scmp.ne.s32.totalorder %s77, %s79
      %p83 = scmp.eq.s32.totalorder %s22, 0
      %p84 = por %p82, %p83
      %p85 = scmp.ne.s32.totalorder %s77, %s79
      %p86 = scmp.eq.s32.totalorder %s27, 3
      %p87 = por %p85, %p86
      %p88 = scmp.ne.s32.totalorder %s79, %s80
      %p89 = scmp.eq.s32.totalorder %s27, 0
      %p90 = por %p88, %p89
      %p91 = scmp.ne.s32.totalorder %s79, %s80
      %p92 = scmp.eq.s32.totalorder %s28, 3
      %p93 = por %p91, %p92
      %p95 = scmp.ne.s32.totalorder %s80, %s94
      %p96 = scmp.eq.s32.totalorder %s28, 0
      %p97 = por %p95, %p96
      %s99 = sadd.s32 %s98, 1
      %p102 = scmp.eq.s32.totalorder %s22, 3
      %p103 = scmp.ne.s32.totalorder %s98, %s100
      %p104 = scmp.eq.s32.totalorder %s22, 0
      %p105 = por %p103, %p104
      %p106 = scmp.ne.s32.totalorder %s98, %s100
      %p107 = scmp.eq.s32.totalorder %s27, 3
      %p108 = por %p106, %p107
      %p109 = scmp.ne.s32.totalorder %s100, %s101
      %p110 = scmp.eq.s32.totalorder %s27, 0
      %p111 = por %p109, %p110
      %p112 = scmp.ne.s32.totalorder %s100, %s101
      %p113 = scmp.eq.s32.totalorder %s28, 3
      %p114 = por %p112, %p113
      %p116 = scmp.ne.s32.totalorder %s101, %s115
      %p117 = scmp.eq.s32.totalorder %s28, 0
      %p118 = por %p116, %p117
      %s120 = sadd.s32 %s119, 1
      %p123 = scmp.eq.s32.totalorder %s22, 3
      %p124 = scmp.ne.s32.totalorder %s119, %s121
      %p125 = scmp.eq.s32.totalorder %s22, 0
      %p126 = por %p124, %p125
      %p127 = scmp.ne.s32.totalorder %s119, %s121
      %p128 = scmp.eq.s32.totalorder %s27, 3
      %p129 = por %p127, %p128
      %p130 = scmp.ne.s32.totalorder %s121, %s122
      %p131 = scmp.eq.s32.totalorder %s27, 0
      %p132 = por %p130, %p131
      %p133 = scmp.ne.s32.totalorder %s121, %s122
      %p134 = scmp.eq.s32.totalorder %s28, 3
      %p135 = por %p133, %p134
      %p137 = scmp.ne.s32.totalorder %s122, %s136
      %p138 = scmp.eq.s32.totalorder %s28, 0
      %p139 = por %p137, %p138
      %s141 = sadd.s32 %s140, 1
      %p144 = scmp.eq.s32.totalorder %s22, 3
      %p145 = scmp.ne.s32.totalorder %s140, %s142
      %p146 = scmp.eq.s32.totalorder %s22, 0
      %p147 = por %p145, %p146
      %p148 = scmp.ne.s32.totalorder %s140, %s142
      %p149 = scmp.eq.s32.totalorder %s27, 3
      %p150 = por %p148, %p149
      %p151 = scmp.ne.s32.totalorder %s142, %s143
      %p152 = scmp.eq.s32.totalorder %s27, 0
      %p153 = por %p151, %p152
      %p154 = scmp.ne.s32.totalorder %s142, %s143
      %p155 = scmp.eq.s32.totalorder %s28, 3
      %p156 = por %p154, %p155
      %p158 = scmp.ne.s32.totalorder %s143, %s157
      %p159 = scmp.eq.s32.totalorder %s28, 0
      %p160 = por %p158, %p159
      %s162 = sadd.s32 %s161, 1
      %p165 = scmp.eq.s32.totalorder %s22, 3
      %p166 = scmp.ne.s32.totalorder %s161, %s163
      %p167 = scmp.eq.s32.totalorder %s22, 0
      %p168 = por %p166, %p167
      %p169 = scmp.ne.s32.totalorder %s161, %s163
      %p170 = scmp.eq.s32.totalorder %s27, 3
      %p171 = por %p169, %p170
      %p172 = scmp.ne.s32.totalorder %s163, %s164
      %p173 = scmp.eq.s32.totalorder %s27, 0
      %p174 = por %p172, %p173
      %p175 = scmp.ne.s32.totalorder %s163, %s164
      %p176 = scmp.eq.s32.totalorder %s28, 3
      %p177 = por %p175, %p176
      %p179 = scmp.ne.s32.totalorder %s164, %s178
      %p180 = scmp.eq.s32.totalorder %s28, 0
      %p181 = por %p179, %p180
      %s183 = sadd.s32 %s182, 1
      %p186 = scmp.eq.s32.totalorder %s22, 3
      %p187 = scmp.ne.s32.totalorder %s182, %s184
      %p188 = scmp.eq.s32.totalorder %s22, 0
      %p189 = por %p187, %p188
      %p190 = scmp.ne.s32.totalorder %s182, %s184
      %p191 = scmp.eq.s32.totalorder %s27, 3
      %p192 = por %p190, %p191
      %p193 = scmp.ne.s32.totalorder %s184, %s185
      %p194 = scmp.eq.s32.totalorder %s27, 0
      %p195 = por %p193, %p194
      %p196 = scmp.ne.s32.totalorder %s184, %s185
      %p197 = scmp.eq.s32.totalorder %s28, 3
      %p198 = por %p196, %p197
      %p200 = scmp.ne.s32.totalorder %s185, %s199
      %p201 = scmp.eq.s32.totalorder %s28, 0
      %p202 = por %p200, %p201
      %s203 = ssub.s32 %s22, %s29
      %p204 = scmp.eq.s32.totalorder %s203, 0
      %s206 = sadd.s32 %s205, 1
      %s207 = scalar_select %p204, %s205, %s206
      %p210 = pneg %p204
      %p211 = scmp.eq.s32.totalorder %s22, 3
      %p212 = por %p210, %p211
      %p213 = scmp.ne.s32.totalorder %s205, %s208
      %p214 = scmp.eq.s32.totalorder %s22, 0
      %p215 = por %p213, %p214
      %p216 = scmp.ne.s32.totalorder %s205, %s208
      %p217 = scmp.eq.s32.totalorder %s27, 3
      %p218 = por %p216, %p217
      %p219 = scmp.ne.s32.totalorder %s208, %s209
      %p220 = scmp.eq.s32.totalorder %s27, 0
      %p221 = por %p219, %p220
      %p222 = scmp.ne.s32.totalorder %s208, %s209
      %p223 = scmp.eq.s32.totalorder %s28, 3
      %p224 = por %p222, %p223
      %p226 = scmp.ne.s32.totalorder %s209, %s225
      %p227 = scmp.eq.s32.totalorder %s28, 0
      %p228 = por %p226, %p227
      %p229 = scmp.le.s32.totalorder 1, %s22
      %p230 = scmp.lt.s32.totalorder %s22, 5
      %p231 = pnand %p229, %p230
      %p232 = pneg %p231
      // Predicated region
      $region9: #{tpu_custom_call.1} parent=5 // pred_check
        _
      $region10: #{tpu_custom_call.1} parent=5 // pred_check_branch
        %234 = sbr.rel (%p231) target = $region12
      $region11: #{tpu_custom_call.1} parent=5 // pred_region
        %s235 = ssub.s32 %s22, 1
        // Predicated region
        $region13: #{tpu_custom_call.1} parent=11 // pred_check
          %p236 = pneg %p69
        $region14: #{tpu_custom_call.1} parent=11 // pred_check_branch
          %238 = sbr.rel (%p236) target = $region16
        $region15: #{tpu_custom_call.1} parent=11 // pred_region
          %s240 = ssub.s32 640, 640
          %241 = vsyncadd [#allocation6], %s240
          %s242 = sshll.u32 [#allocation5], 4
          %s243 = int_to_ptr.vmem [resolvable:$true] %s242
          %248 = dma.hbm_to_vmem [thread:$0]  %s1, 640, %s243, [#allocation6], 64, 64, 4
        $region16: #{tpu_custom_call.1} parent=11 // pred_fallthru
          _
        // Predicated region
        $region17: #{tpu_custom_call.1} parent=11 // pred_check
          %p249 = pneg %p90
        $region18: #{tpu_custom_call.1} parent=11 // pred_check_branch
          %251 = sbr.rel (%p249) target = $region20
        $region19: #{tpu_custom_call.1} parent=11 // pred_region
          _
        $region20: #{tpu_custom_call.1} parent=11 // pred_fallthru
          _
        // Predicated region
        $region21: #{tpu_custom_call.1} parent=11 // pred_check
          %p252 = pneg %p111
        $region22: #{tpu_custom_call.1} parent=11 // pred_check_branch
          %254 = sbr.rel (%p252) target = $region24
        $region23: #{tpu_custom_call.1} parent=11 // pred_region
          %s256 = ssub.s32 2048, 2048
          %257 = vsyncadd [#allocation6], %s256
          %s258 = sshll.u32 [#allocation7], 4
          %s259 = int_to_ptr.vmem [resolvable:$true] %s258
          %264 = dma.hbm_to_vmem [thread:$0]  %s3, 2048, %s259, [#allocation6], 64, 64, 4
        $region24: #{tpu_custom_call.1} parent=11 // pred_fallthru
          _
        // Predicated region
        $region25: #{tpu_custom_call.1} parent=11 // pred_check
          %p265 = pneg %p132
        $region26: #{tpu_custom_call.1} parent=11 // pred_check_branch
          %267 = sbr.rel (%p265) target = $region28
        $region27: #{tpu_custom_call.1} parent=11 // pred_region
          _
        $region28: #{tpu_custom_call.1} parent=11 // pred_fallthru
          _
        // Predicated region
        $region29: #{tpu_custom_call.1} parent=11 // pred_check
          %p268 = pneg %p153
        $region30: #{tpu_custom_call.1} parent=11 // pred_check_branch
          %270 = sbr.rel (%p268) target = $region32
        $region31: #{tpu_custom_call.1} parent=11 // pred_region
          %s272 = ssub.s32 2048, 2048
          %273 = vsyncadd [#allocation9], %s272
          %s274 = sshll.u32 [#allocation8], 4
          %s275 = int_to_ptr.vmem [resolvable:$true] %s274
          %280 = dma.hbm_to_vmem [thread:$0]  %s5, 2048, %s275, [#allocation9], 64, 64, 4
        $region32: #{tpu_custom_call.1} parent=11 // pred_fallthru
          _
        // Predicated region
        $region33: #{tpu_custom_call.1} parent=11 // pred_check
          %p281 = pneg %p174
        $region34: #{tpu_custom_call.1} parent=11 // pred_check_branch
          %283 = sbr.rel (%p281) target = $region36
        $region35: #{tpu_custom_call.1} parent=11 // pred_region
          _
        $region36: #{tpu_custom_call.1} parent=11 // pred_fallthru
          _
        // Predicated region
        $region37: #{tpu_custom_call.1} parent=11 // pred_check
          %p284 = pneg %p195
        $region38: #{tpu_custom_call.1} parent=11 // pred_check_branch
          %286 = sbr.rel (%p284) target = $region40
        $region39: #{tpu_custom_call.1} parent=11 // pred_region
          %s288 = ssub.s32 1024, 1024
          %289 = vsyncadd [#allocation9], %s288
          %s290 = sshll.u32 [#allocation10], 4
          %s291 = int_to_ptr.vmem [resolvable:$true] %s290
          %296 = dma.hbm_to_vmem [thread:$0]  %s7, 1024, %s291, [#allocation9], 64, 64, 4
        $region40: #{tpu_custom_call.1} parent=11 // pred_fallthru
          _
      $region12: #{tpu_custom_call.1} parent=5 // pred_fallthru
        _
      %p297 = scmp.lt.s32.totalorder %s22, 4
      // Predicated region
      $region41: #{tpu_custom_call.1} parent=5 // pred_check
        %p298 = pneg %p297
      $region42: #{tpu_custom_call.1} parent=5 // pred_check_branch
        %300 = sbr.rel (%p298) target = $region44
      $region43: #{tpu_custom_call.1} parent=5 // pred_region
        // Predicated region
        $region45: #{tpu_custom_call.1} parent=43 // pred_check
          %p301 = pneg %p42
        $region46: #{tpu_custom_call.1} parent=43 // pred_check_branch
          %303 = sbr.rel (%p301) target = $region48
        $region47: #{tpu_custom_call.1} parent=43 // pred_region
          %s304 = sand.u32 %s32, 1
          %s305 = scalar_lea.sflag [#allocation3], %s304
          %s306 = sand.u32 %s32, 1
          %s307 = smul.addr %s306, 8
          %s308 = scalar_lea.vmem [#allocation2], %s307
          %s309 = smul.u32 2, %s22
          %s311 = ssub.s32 128, 128
          %312 = vsyncadd %s305, %s311
          %s313 = smul.addr %s309, 64
          %s314 = scalar_lea.hbm %s0, %s313
          %s315 = sshll.u32 %s308, 4
          %s316 = int_to_ptr.vmem [resolvable:$true] %s315
          %321 = dma.hbm_to_vmem [thread:$0]  %s314, 128, %s316, %s305, 64, 64, 4
        $region48: #{tpu_custom_call.1} parent=43 // pred_fallthru
          _
      $region44: #{tpu_custom_call.1} parent=5 // pred_fallthru
        _
      %p322 = scmp.le.s32.totalorder 1, %s22
      %p323 = scmp.lt.s32.totalorder %s22, 5
      %p324 = pnand %p322, %p323
      %p325 = pneg %p324
      // Predicated region
      $region49: #{tpu_custom_call.1} parent=5 // pred_check
        _
      $region50: #{tpu_custom_call.1} parent=5 // pred_check_branch
        %327 = sbr.rel (%p324) target = $region52
      $region51: #{tpu_custom_call.1} parent=5 // pred_region
        %s328 = ssub.s32 %s22, 1
        %s329 = sand.u32 %s35, 1
        %s330 = scalar_lea.sflag [#allocation3], %s329
        %s331 = sand.u32 %s35, 1
        %s332 = smul.addr %s331, 8
        %s333 = scalar_lea.vmem [#allocation2], %s332
        // Predicated region
        $region53: #{tpu_custom_call.1} parent=51 // pred_check
          %p334 = pneg %p48
        $region54: #{tpu_custom_call.1} parent=51 // pred_check_branch
          %336 = sbr.rel (%p334) target = $region56
        $region55: #{tpu_custom_call.1} parent=51 // pred_region
          %337 = dma.done %s330, 128
        $region56: #{tpu_custom_call.1} parent=51 // pred_fallthru
          _
        // Predicated region
        $region57: #{tpu_custom_call.1} parent=51 // pred_check
          %p338 = pneg %p69
        $region58: #{tpu_custom_call.1} parent=51 // pred_check_branch
          %340 = sbr.rel (%p338) target = $region60
        $region59: #{tpu_custom_call.1} parent=51 // pred_region
          %341 = dma.done [#allocation6], 640
        $region60: #{tpu_custom_call.1} parent=51 // pred_fallthru
          _
        // Predicated region
        $region61: #{tpu_custom_call.1} parent=51 // pred_check
          %p342 = pneg %p111
        $region62: #{tpu_custom_call.1} parent=51 // pred_check_branch
          %344 = sbr.rel (%p342) target = $region64
        $region63: #{tpu_custom_call.1} parent=51 // pred_region
          %345 = dma.done [#allocation6], 2048
        $region64: #{tpu_custom_call.1} parent=51 // pred_fallthru
          _
        // Predicated region
        $region65: #{tpu_custom_call.1} parent=51 // pred_check
          %p346 = pneg %p153
        $region66: #{tpu_custom_call.1} parent=51 // pred_check_branch
          %348 = sbr.rel (%p346) target = $region68
        $region67: #{tpu_custom_call.1} parent=51 // pred_region
          %349 = dma.done [#allocation9], 2048
        $region68: #{tpu_custom_call.1} parent=51 // pred_fallthru
          _
        // Predicated region
        $region69: #{tpu_custom_call.1} parent=51 // pred_check
          %p350 = pneg %p195
        $region70: #{tpu_custom_call.1} parent=51 // pred_check_branch
          %352 = sbr.rel (%p350) target = $region72
        $region71: #{tpu_custom_call.1} parent=51 // pred_region
          %353 = dma.done [#allocation9], 1024
        $region72: #{tpu_custom_call.1} parent=51 // pred_fallthru
          _
        %s354 = sand.u32 %s35, 1
        %s355 = scalar_lea.sflag [#allocation3], %s354
        %s356 = sand.u32 %s35, 1
        %s357 = smul.addr %s356, 8
        %s358 = scalar_lea.vmem [#allocation2], %s357
        %p359 = pneg %p48
        %p360 = pneg %p45
        %p361 = pneg %p69
        %p362 = pneg %p66
        %p363 = pneg %p90
        %p364 = pneg %p87
        %p365 = pneg %p111
        %p366 = pneg %p108
        %p367 = pneg %p132
        %p368 = pneg %p129
        %p369 = pneg %p153
        %p370 = pneg %p150
        %p371 = pneg %p174
        %p372 = pneg %p171
        %p373 = pneg %p195
        %p374 = pneg %p192
        %p375 = pneg %p221
        %p376 = pneg %p218
        %s377 = sand.u32 %s208, 1
        %s378 = scalar_lea.sflag [#allocation4], %s377
        %s379 = sand.u32 %s208, 1
        %s380 = smul.addr %s379, 8
        %s381 = scalar_lea.vmem [#allocation11], %s380
        %s382 = smul.u32 2, %s27
        %s383 = smul.u32 2, %s27
        %v385 = vld [vmem:[%s333] sm:$0xf]
        %v386 = vld [vmem:[%s333 + $0x4] sm:$0xf]
        %v387 = vld [vmem:[#allocation5] sm:$0xf]
        %v388 = vld [vmem:[#allocation5 + $0x4] sm:$0xf]
        %v389 = vld [vmem:[#allocation5 + $0x8] sm:$0xf]
        %v390 = vld [vmem:[#allocation5 + $0xc] sm:$0xf]
        %v391 = vld [vmem:[#allocation5 + $0x10] sm:$0xf]
        %v392 = vld [vmem:[#allocation5 + $0x14] sm:$0xf]
        %v393 = vld [vmem:[#allocation5 + $0x18] sm:$0xf]
        %v394 = vld [vmem:[#allocation5 + $0x1c] sm:$0xf]
        %v395 = vld [vmem:[#allocation5 + $0x20] sm:$0xf]
        %v396 = vld [vmem:[#allocation5 + $0x24] sm:$0xf]
        %v397 = vld [vmem:[%s2] sm:$0x1]
        %v399 = vlaneseq
        %v400 = vshrl.u32 %v399, 7
        %v401 = vsub.s32 0, %v400
        %v402 = vrot.slane %v397, %v401
        %v406 = vunpack.c.l.b16 %v385
        %v407 = vunpack.c.l.b16 %v386
        %v408 = vpack.c.b16 %v407, %v406
        %v419 = vunpack.c.l.b16 %v387
        %v420 = vunpack.c.l.b16 %v388
        %v421 = vunpack.c.l.b16 %v389
        %v422 = vunpack.c.l.b16 %v390
        %v423 = vunpack.c.l.b16 %v391
        %v424 = vunpack.c.l.b16 %v392
        %v425 = vunpack.c.l.b16 %v393
        %v426 = vunpack.c.l.b16 %v394
        %v427 = vunpack.c.l.b16 %v395
        %v428 = vunpack.c.l.b16 %v396
        %v429 = vpack.c.b16 %v420, %v419
        %v430 = vpack.c.b16 %v422, %v421
        %v431 = vpack.c.b16 %v424, %v423
        %v432 = vpack.c.b16 %v426, %v425
        %v433 = vpack.c.b16 %v428, %v427
        %vm439 = vcmask 654336
        %v441 = vsel %vm439, %v408, 0
        %443 = vmatprep.subr.bf16.mxu0 0
        %444 = vmatpush1.bf16.msra.mxu0 0
        %445 = vmatprep.subr.bf16.mxu0 0
        %446 = vmatpush1.bf16.msra.mxu0 0
        %447 = vmatprep.subr.bf16.mxu0 0
        %448 = vmatpush1.bf16.msra.mxu0 0
        %449 = vmatprep.subr.bf16.mxu0 0
        %450 = vmatpush1.bf16.msra.mxu0 %v433
        %451 = vmatprep.subr.bf16.mxu0 0
        %452 = vmatpush1.bf16.msra.mxu0 %v432
        %453 = vmatprep.subr.bf16.mxu0 0
        %454 = vmatpush1.bf16.msra.mxu0 %v431
        %455 = vmatprep.subr.bf16.mxu0 0
        %456 = vmatpush1.bf16.msra.mxu0 %v430
        %457 = vmatprep.subr.bf16.mxu0 0
        %458 = vmatpush1.bf16.msra.mxu0 %v429
        %459 = vmatprep.subr.bf16.mxu0 0
        %460 = vmatpush2.bf16.msra.mxu0 0
        %461 = vmatprep.subr.bf16.mxu0 0
        %462 = vmatpush2.bf16.msra.mxu0 0
        %463 = vmatprep.subr.bf16.mxu0 0
        %464 = vmatpush2.bf16.msra.mxu0 0
        %465 = vmatprep.subr.bf16.mxu0 0
        %466 = vmatpush2.bf16.msra.mxu0 0
        %467 = vmatprep.subr.bf16.mxu0 0
        %468 = vmatpush2.bf16.msra.mxu0 0
        %469 = vmatprep.subr.bf16.mxu0 0
        %470 = vmatpush2.bf16.msra.mxu0 0
        %471 = vmatprep.subr.bf16.mxu0 0
        %472 = vmatpush2.bf16.msra.mxu0 0
        %473 = vmatprep.subr.bf16.mxu0 0
        %474 = vmatpush2.bf16.msra.mxu0 0
        %475 = vmatprep.mubr.bf16.mxu0 0
        %476 = vmatmul.mubr.bf16.gmra.mxu0 %v441
        %v477 = vpop.f32.mrf.mxu0
        %v478 = vadd.f32 %v402, %v477
        %v479 = vpop.f32.mrf.mxu0
        %v480 = vpop.f32.mrf.mxu0
        %v481 = vadd.f32 %v402, %v480
        %v482 = vpop.f32.mrf.mxu0
        %483 = vdwg.mxu0
        %v484 = vpack.c.bf16 %v481, %v478
        %v485 = vtanh.bf16.pop %v484
        %v486 = vunpack.c.l.bf16 %v485
        %v487 = vunpack.c.h.bf16 %v485
        %v488 = vld [vmem:[#allocation7] sm:$0xf]
        %v489 = vld [vmem:[#allocation7 + $0x4] sm:$0xf]
        %v490 = vld [vmem:[#allocation7 + $0x8] sm:$0xf]
        %v491 = vld [vmem:[#allocation7 + $0xc] sm:$0xf]
        %v492 = vld [vmem:[#allocation7 + $0x10] sm:$0xf]
        %v493 = vld [vmem:[#allocation7 + $0x14] sm:$0xf]
        %v494 = vld [vmem:[#allocation7 + $0x18] sm:$0xf]
        %v495 = vld [vmem:[#allocation7 + $0x1c] sm:$0xf]
        %v496 = vld [vmem:[#allocation7 + $0x20] sm:$0xf]
        %v497 = vld [vmem:[#allocation7 + $0x24] sm:$0xf]
        %v498 = vld [vmem:[#allocation7 + $0x28] sm:$0xf]
        %v499 = vld [vmem:[#allocation7 + $0x2c] sm:$0xf]
        %v500 = vld [vmem:[#allocation7 + $0x30] sm:$0xf]
        %v501 = vld [vmem:[#allocation7 + $0x34] sm:$0xf]
        %v502 = vld [vmem:[#allocation7 + $0x38] sm:$0xf]
        %v503 = vld [vmem:[#allocation7 + $0x3c] sm:$0xf]
        %v504 = vld [vmem:[%s4] sm:$0x1]
        %v506 = vlaneseq
        %v507 = vshrl.u32 %v506, 7
        %v508 = vsub.s32 0, %v507
        %v509 = vrot.slane %v504, %v508
        %v527 = vunpack.c.l.b16 %v488
        %v528 = vunpack.c.l.b16 %v489
        %v529 = vunpack.c.l.b16 %v490
        %v530 = vunpack.c.l.b16 %v491
        %v531 = vunpack.c.l.b16 %v492
        %v532 = vunpack.c.l.b16 %v493
        %v533 = vunpack.c.l.b16 %v494
        %v534 = vunpack.c.l.b16 %v495
        %v535 = vunpack.c.l.b16 %v496
        %v536 = vunpack.c.l.b16 %v497
        %v537 = vunpack.c.l.b16 %v498
        %v538 = vunpack.c.l.b16 %v499
        %v539 = vunpack.c.l.b16 %v500
        %v540 = vunpack.c.l.b16 %v501
        %v541 = vunpack.c.l.b16 %v502
        %v542 = vunpack.c.l.b16 %v503
        %v543 = vpack.c.b16 %v528, %v527
        %v544 = vpack.c.b16 %v530, %v529
        %v545 = vpack.c.b16 %v532, %v531
        %v546 = vpack.c.b16 %v534, %v533
        %v547 = vpack.c.b16 %v536, %v535
        %v548 = vpack.c.b16 %v538, %v537
        %v549 = vpack.c.b16 %v540, %v539
        %v550 = vpack.c.b16 %v542, %v541
        %559 = vmatprep.subr.bf16.mxu0 0
        %560 = vmatpush1.bf16.msra.mxu0 %v550
        %561 = vmatprep.subr.bf16.mxu0 0
        %562 = vmatpush1.bf16.msra.mxu0 %v549
        %563 = vmatprep.subr.bf16.mxu0 0
        %564 = vmatpush1.bf16.msra.mxu0 %v548
        %565 = vmatprep.subr.bf16.mxu0 0
        %566 = vmatpush1.bf16.msra.mxu0 %v547
        %567 = vmatprep.subr.bf16.mxu0 0
        %568 = vmatpush1.bf16.msra.mxu0 %v546
        %569 = vmatprep.subr.bf16.mxu0 0
        %570 = vmatpush1.bf16.msra.mxu0 %v545
        %571 = vmatprep.subr.bf16.mxu0 0
        %572 = vmatpush1.bf16.msra.mxu0 %v544
        %573 = vmatprep.subr.bf16.mxu0 0
        %574 = vmatpush1.bf16.msra.mxu0 %v543
        %575 = vmatprep.subr.bf16.mxu0 0
        %576 = vmatpush2.bf16.msra.mxu0 0
        %577 = vmatprep.subr.bf16.mxu0 0
        %578 = vmatpush2.bf16.msra.mxu0 0
        %579 = vmatprep.subr.bf16.mxu0 0
        %580 = vmatpush2.bf16.msra.mxu0 0
        %581 = vmatprep.subr.bf16.mxu0 0
        %582 = vmatpush2.bf16.msra.mxu0 0
        %583 = vmatprep.subr.bf16.mxu0 0
        %584 = vmatpush2.bf16.msra.mxu0 0
        %585 = vmatprep.subr.bf16.mxu0 0
        %586 = vmatpush2.bf16.msra.mxu0 0
        %587 = vmatprep.subr.bf16.mxu0 0
        %588 = vmatpush2.bf16.msra.mxu0 0
        %589 = vmatprep.subr.bf16.mxu0 0
        %590 = vmatpush2.bf16.msra.mxu0 0
        %591 = vmatprep.mubr.bf16.mxu0 0
        %592 = vmatmul.mubr.bf16.gmra.mxu0 %v485
        %v593 = vpop.f32.mrf.mxu0
        %v594 = vadd.f32 %v509, %v593
        %v595 = vpop.f32.mrf.mxu0
        %v596 = vpop.f32.mrf.mxu0
        %v597 = vadd.f32 %v509, %v596
        %v598 = vpop.f32.mrf.mxu0
        %599 = vdwg.mxu0
        %v600 = vpack.c.bf16 %v597, %v594
        %v601 = vtanh.bf16.pop %v600
        %v602 = vld [vmem:[#allocation8] sm:$0xf]
        %v603 = vld [vmem:[#allocation8 + $0x4] sm:$0xf]
        %v604 = vld [vmem:[#allocation8 + $0x8] sm:$0xf]
        %v605 = vld [vmem:[#allocation8 + $0xc] sm:$0xf]
        %v606 = vld [vmem:[#allocation8 + $0x10] sm:$0xf]
        %v607 = vld [vmem:[#allocation8 + $0x14] sm:$0xf]
        %v608 = vld [vmem:[#allocation8 + $0x18] sm:$0xf]
        %v609 = vld [vmem:[#allocation8 + $0x1c] sm:$0xf]
        %v610 = vld [vmem:[#allocation8 + $0x20] sm:$0xf]
        %v611 = vld [vmem:[#allocation8 + $0x24] sm:$0xf]
        %v612 = vld [vmem:[#allocation8 + $0x28] sm:$0xf]
        %v613 = vld [vmem:[#allocation8 + $0x2c] sm:$0xf]
        %v614 = vld [vmem:[#allocation8 + $0x30] sm:$0xf]
        %v615 = vld [vmem:[#allocation8 + $0x34] sm:$0xf]
        %v616 = vld [vmem:[#allocation8 + $0x38] sm:$0xf]
        %v617 = vld [vmem:[#allocation8 + $0x3c] sm:$0xf]
        %v618 = vld [vmem:[%s6] sm:$0x1]
        %v620 = vlaneseq
        %v621 = vshrl.u32 %v620, 7
        %v622 = vsub.s32 0, %v621
        %v623 = vrot.slane %v618, %v622
        %v641 = vunpack.c.l.b16 %v602
        %v642 = vunpack.c.l.b16 %v603
        %v643 = vunpack.c.l.b16 %v604
        %v644 = vunpack.c.l.b16 %v605
        %v645 = vunpack.c.l.b16 %v606
        %v646 = vunpack.c.l.b16 %v607
        %v647 = vunpack.c.l.b16 %v608
        %v648 = vunpack.c.l.b16 %v609
        %v649 = vunpack.c.l.b16 %v610
        %v650 = vunpack.c.l.b16 %v611
        %v651 = vunpack.c.l.b16 %v612
        %v652 = vunpack.c.l.b16 %v613
        %v653 = vunpack.c.l.b16 %v614
        %v654 = vunpack.c.l.b16 %v615
        %v655 = vunpack.c.l.b16 %v616
        %v656 = vunpack.c.l.b16 %v617
        %v657 = vpack.c.b16 %v642, %v641
        %v658 = vpack.c.b16 %v644, %v643
        %v659 = vpack.c.b16 %v646, %v645
        %v660 = vpack.c.b16 %v648, %v647
        %v661 = vpack.c.b16 %v650, %v649
        %v662 = vpack.c.b16 %v652, %v651
        %v663 = vpack.c.b16 %v654, %v653
        %v664 = vpack.c.b16 %v656, %v655
        %673 = vmatprep.subr.bf16.mxu0 0
        %674 = vmatpush1.bf16.msra.mxu0 %v664
        %675 = vmatprep.subr.bf16.mxu0 0
        %676 = vmatpush1.bf16.msra.mxu0 %v663
        %677 = vmatprep.subr.bf16.mxu0 0
        %678 = vmatpush1.bf16.msra.mxu0 %v662
        %679 = vmatprep.subr.bf16.mxu0 0
        %680 = vmatpush1.bf16.msra.mxu0 %v661
        %681 = vmatprep.subr.bf16.mxu0 0
        %682 = vmatpush1.bf16.msra.mxu0 %v660
        %683 = vmatprep.subr.bf16.mxu0 0
        %684 = vmatpush1.bf16.msra.mxu0 %v659
        %685 = vmatprep.subr.bf16.mxu0 0
        %686 = vmatpush1.bf16.msra.mxu0 %v658
        %687 = vmatprep.subr.bf16.mxu0 0
        %688 = vmatpush1.bf16.msra.mxu0 %v657
        %689 = vmatprep.subr.bf16.mxu0 0
        %690 = vmatpush2.bf16.msra.mxu0 0
        %691 = vmatprep.subr.bf16.mxu0 0
        %692 = vmatpush2.bf16.msra.mxu0 0
        %693 = vmatprep.subr.bf16.mxu0 0
        %694 = vmatpush2.bf16.msra.mxu0 0
        %695 = vmatprep.subr.bf16.mxu0 0
        %696 = vmatpush2.bf16.msra.mxu0 0
        %697 = vmatprep.subr.bf16.mxu0 0
        %698 = vmatpush2.bf16.msra.mxu0 0
        %699 = vmatprep.subr.bf16.mxu0 0
        %700 = vmatpush2.bf16.msra.mxu0 0
        %701 = vmatprep.subr.bf16.mxu0 0
        %702 = vmatpush2.bf16.msra.mxu0 0
        %703 = vmatprep.subr.bf16.mxu0 0
        %704 = vmatpush2.bf16.msra.mxu0 0
        %705 = vmatprep.mubr.bf16.mxu0 0
        %706 = vmatmul.mubr.bf16.gmra.mxu0 %v601
        %v707 = vpop.f32.mrf.mxu0
        %v708 = vadd.f32 %v623, %v707
        %v709 = vpop.f32.mrf.mxu0
        %v710 = vpop.f32.mrf.mxu0
        %v711 = vadd.f32 %v623, %v710
        %v712 = vpop.f32.mrf.mxu0
        %713 = vdwg.mxu0
        %v714 = vpack.c.bf16 %v711, %v708
        %v715 = vtanh.bf16.pop %v714
        %v716 = vunpack.c.l.bf16 %v715
        %v717 = vunpack.c.h.bf16 %v715
        %v718 = vadd.f32 %v716, %v486
        %v719 = vadd.f32 %v717, %v487
        %v720 = vpack.c.bf16 %v719, %v718
        %s721 = scalar_lea.vmem [#allocation7], 64
        %v722 = vld [vmem:[%s721] sm:$0xf]
        %v723 = vld [vmem:[%s721 + $0x4] sm:$0xf]
        %v724 = vld [vmem:[%s721 + $0x8] sm:$0xf]
        %v725 = vld [vmem:[%s721 + $0xc] sm:$0xf]
        %v726 = vld [vmem:[%s721 + $0x10] sm:$0xf]
        %v727 = vld [vmem:[%s721 + $0x14] sm:$0xf]
        %v728 = vld [vmem:[%s721 + $0x18] sm:$0xf]
        %v729 = vld [vmem:[%s721 + $0x1c] sm:$0xf]
        %v730 = vld [vmem:[%s721 + $0x20] sm:$0xf]
        %v731 = vld [vmem:[%s721 + $0x24] sm:$0xf]
        %v732 = vld [vmem:[%s721 + $0x28] sm:$0xf]
        %v733 = vld [vmem:[%s721 + $0x2c] sm:$0xf]
        %v734 = vld [vmem:[%s721 + $0x30] sm:$0xf]
        %v735 = vld [vmem:[%s721 + $0x34] sm:$0xf]
        %v736 = vld [vmem:[%s721 + $0x38] sm:$0xf]
        %v737 = vld [vmem:[%s721 + $0x3c] sm:$0xf]
        %s738 = scalar_lea.vmem %s4, 1
        %v739 = vld [vmem:[%s738] sm:$0x1]
        %v741 = vlaneseq
        %v742 = vshrl.u32 %v741, 7
        %v743 = vsub.s32 0, %v742
        %v744 = vrot.slane %v739, %v743
        %v762 = vunpack.c.l.b16 %v722
        %v763 = vunpack.c.l.b16 %v723
        %v764 = vunpack.c.l.b16 %v724
        %v765 = vunpack.c.l.b16 %v725
        %v766 = vunpack.c.l.b16 %v726
        %v767 = vunpack.c.l.b16 %v727
        %v768 = vunpack.c.l.b16 %v728
        %v769 = vunpack.c.l.b16 %v729
        %v770 = vunpack.c.l.b16 %v730
        %v771 = vunpack.c.l.b16 %v731
        %v772 = vunpack.c.l.b16 %v732
        %v773 = vunpack.c.l.b16 %v733
        %v774 = vunpack.c.l.b16 %v734
        %v775 = vunpack.c.l.b16 %v735
        %v776 = vunpack.c.l.b16 %v736
        %v777 = vunpack.c.l.b16 %v737
        %v778 = vpack.c.b16 %v763, %v762
        %v779 = vpack.c.b16 %v765, %v764
        %v780 = vpack.c.b16 %v767, %v766
        %v781 = vpack.c.b16 %v769, %v768
        %v782 = vpack.c.b16 %v771, %v770
        %v783 = vpack.c.b16 %v773, %v772
        %v784 = vpack.c.b16 %v775, %v774
        %v785 = vpack.c.b16 %v777, %v776
        %794 = vmatprep.subr.bf16.mxu0 0
        %795 = vmatpush1.bf16.msra.mxu0 %v785
        %796 = vmatprep.subr.bf16.mxu0 0
        %797 = vmatpush1.bf16.msra.mxu0 %v784
        %798 = vmatprep.subr.bf16.mxu0 0
        %799 = vmatpush1.bf16.msra.mxu0 %v783
        %800 = vmatprep.subr.bf16.mxu0 0
        %801 = vmatpush1.bf16.msra.mxu0 %v782
        %802 = vmatprep.subr.bf16.mxu0 0
        %803 = vmatpush1.bf16.msra.mxu0 %v781
        %804 = vmatprep.subr.bf16.mxu0 0
        %805 = vmatpush1.bf16.msra.mxu0 %v780
        %806 = vmatprep.subr.bf16.mxu0 0
        %807 = vmatpush1.bf16.msra.mxu0 %v779
        %808 = vmatprep.subr.bf16.mxu0 0
        %809 = vmatpush1.bf16.msra.mxu0 %v778
        %810 = vmatprep.subr.bf16.mxu0 0
        %811 = vmatpush2.bf16.msra.mxu0 0
        %812 = vmatprep.subr.bf16.mxu0 0
        %813 = vmatpush2.bf16.msra.mxu0 0
        %814 = vmatprep.subr.bf16.mxu0 0
        %815 = vmatpush2.bf16.msra.mxu0 0
        %816 = vmatprep.subr.bf16.mxu0 0
        %817 = vmatpush2.bf16.msra.mxu0 0
        %818 = vmatprep.subr.bf16.mxu0 0
        %819 = vmatpush2.bf16.msra.mxu0 0
        %820 = vmatprep.subr.bf16.mxu0 0
        %821 = vmatpush2.bf16.msra.mxu0 0
        %822 = vmatprep.subr.bf16.mxu0 0
        %823 = vmatpush2.bf16.msra.mxu0 0
        %824 = vmatprep.subr.bf16.mxu0 0
        %825 = vmatpush2.bf16.msra.mxu0 0
        %826 = vmatprep.mubr.bf16.mxu0 0
        %827 = vmatmul.mubr.bf16.gmra.mxu0 %v720
        %v828 = vpop.f32.mrf.mxu0
        %v829 = vadd.f32 %v744, %v828
        %v830 = vpop.f32.mrf.mxu0
        %v831 = vpop.f32.mrf.mxu0
        %v832 = vadd.f32 %v744, %v831
        %v833 = vpop.f32.mrf.mxu0
        %834 = vdwg.mxu0
        %v835 = vpack.c.bf16 %v832, %v829
        %v836 = vtanh.bf16.pop %v835
        %s837 = scalar_lea.vmem [#allocation8], 64
        %v838 = vld [vmem:[%s837] sm:$0xf]
        %v839 = vld [vmem:[%s837 + $0x4] sm:$0xf]
        %v840 = vld [vmem:[%s837 + $0x8] sm:$0xf]
        %v841 = vld [vmem:[%s837 + $0xc] sm:$0xf]
        %v842 = vld [vmem:[%s837 + $0x10] sm:$0xf]
        %v843 = vld [vmem:[%s837 + $0x14] sm:$0xf]
        %v844 = vld [vmem:[%s837 + $0x18] sm:$0xf]
        %v845 = vld [vmem:[%s837 + $0x1c] sm:$0xf]
        %v846 = vld [vmem:[%s837 + $0x20] sm:$0xf]
        %v847 = vld [vmem:[%s837 + $0x24] sm:$0xf]
        %v848 = vld [vmem:[%s837 + $0x28] sm:$0xf]
        %v849 = vld [vmem:[%s837 + $0x2c] sm:$0xf]
        %v850 = vld [vmem:[%s837 + $0x30] sm:$0xf]
        %v851 = vld [vmem:[%s837 + $0x34] sm:$0xf]
        %v852 = vld [vmem:[%s837 + $0x38] sm:$0xf]
        %v853 = vld [vmem:[%s837 + $0x3c] sm:$0xf]
        %s854 = scalar_lea.vmem %s6, 1
        %v855 = vld [vmem:[%s854] sm:$0x1]
        %v857 = vlaneseq
        %v858 = vshrl.u32 %v857, 7
        %v859 = vsub.s32 0, %v858
        %v860 = vrot.slane %v855, %v859
        %v878 = vunpack.c.l.b16 %v838
        %v879 = vunpack.c.l.b16 %v839
        %v880 = vunpack.c.l.b16 %v840
        %v881 = vunpack.c.l.b16 %v841
        %v882 = vunpack.c.l.b16 %v842
        %v883 = vunpack.c.l.b16 %v843
        %v884 = vunpack.c.l.b16 %v844
        %v885 = vunpack.c.l.b16 %v845
        %v886 = vunpack.c.l.b16 %v846
        %v887 = vunpack.c.l.b16 %v847
        %v888 = vunpack.c.l.b16 %v848
        %v889 = vunpack.c.l.b16 %v849
        %v890 = vunpack.c.l.b16 %v850
        %v891 = vunpack.c.l.b16 %v851
        %v892 = vunpack.c.l.b16 %v852
        %v893 = vunpack.c.l.b16 %v853
        %v894 = vpack.c.b16 %v879, %v878
        %v895 = vpack.c.b16 %v881, %v880
        %v896 = vpack.c.b16 %v883, %v882
        %v897 = vpack.c.b16 %v885, %v884
        %v898 = vpack.c.b16 %v887, %v886
        %v899 = vpack.c.b16 %v889, %v888
        %v900 = vpack.c.b16 %v891, %v890
        %v901 = vpack.c.b16 %v893, %v892
        %910 = vmatprep.subr.bf16.mxu0 0
        %911 = vmatpush1.bf16.msra.mxu0 %v901
        %912 = vmatprep.subr.bf16.mxu0 0
        %913 = vmatpush1.bf16.msra.mxu0 %v900
        %914 = vmatprep.subr.bf16.mxu0 0
        %915 = vmatpush1.bf16.msra.mxu0 %v899
        %916 = vmatprep.subr.bf16.mxu0 0
        %917 = vmatpush1.bf16.msra.mxu0 %v898
        %918 = vmatprep.subr.bf16.mxu0 0
        %919 = vmatpush1.bf16.msra.mxu0 %v897
        %920 = vmatprep.subr.bf16.mxu0 0
        %921 = vmatpush1.bf16.msra.mxu0 %v896
        %922 = vmatprep.subr.bf16.mxu0 0
        %923 = vmatpush1.bf16.msra.mxu0 %v895
        %924 = vmatprep.subr.bf16.mxu0 0
        %925 = vmatpush1.bf16.msra.mxu0 %v894
        %926 = vmatprep.subr.bf16.mxu0 0
        %927 = vmatpush2.bf16.msra.mxu0 0
        %928 = vmatprep.subr.bf16.mxu0 0
        %929 = vmatpush2.bf16.msra.mxu0 0
        %930 = vmatprep.subr.bf16.mxu0 0
        %931 = vmatpush2.bf16.msra.mxu0 0
        %932 = vmatprep.subr.bf16.mxu0 0
        %933 = vmatpush2.bf16.msra.mxu0 0
        %934 = vmatprep.subr.bf16.mxu0 0
        %935 = vmatpush2.bf16.msra.mxu0 0
        %936 = vmatprep.subr.bf16.mxu0 0
        %937 = vmatpush2.bf16.msra.mxu0 0
        %938 = vmatprep.subr.bf16.mxu0 0
        %939 = vmatpush2.bf16.msra.mxu0 0
        %940 = vmatprep.subr.bf16.mxu0 0
        %941 = vmatpush2.bf16.msra.mxu0 0
        %942 = vmatprep.mubr.bf16.mxu0 0
        %943 = vmatmul.mubr.bf16.gmra.mxu0 %v836
        %v944 = vpop.f32.mrf.mxu0
        %v945 = vadd.f32 %v860, %v944
        %v946 = vpop.f32.mrf.mxu0
        %v947 = vpop.f32.mrf.mxu0
        %v948 = vadd.f32 %v860, %v947
        %v949 = vpop.f32.mrf.mxu0
        %950 = vdwg.mxu0
        %v951 = vpack.c.bf16 %v948, %v945
        %v952 = vtanh.bf16.pop %v951
        %v953 = vunpack.c.l.bf16 %v952
        %v954 = vunpack.c.h.bf16 %v952
        %v955 = vadd.f32 %v953, %v718
        %v956 = vadd.f32 %v954, %v719
        %v957 = vpack.c.bf16 %v956, %v955
        %v958 = vld [vmem:[#allocation10] sm:$0xf]
        %v959 = vld [vmem:[#allocation10 + $0x4] sm:$0xf]
        %v960 = vld [vmem:[#allocation10 + $0x8] sm:$0xf]
        %v961 = vld [vmem:[#allocation10 + $0xc] sm:$0xf]
        %v962 = vld [vmem:[#allocation10 + $0x10] sm:$0xf]
        %v963 = vld [vmem:[#allocation10 + $0x14] sm:$0xf]
        %v964 = vld [vmem:[#allocation10 + $0x18] sm:$0xf]
        %v965 = vld [vmem:[#allocation10 + $0x1c] sm:$0xf]
        %v966 = vld [vmem:[#allocation10 + $0x20] sm:$0xf]
        %v967 = vld [vmem:[#allocation10 + $0x24] sm:$0xf]
        %v968 = vld [vmem:[#allocation10 + $0x28] sm:$0xf]
        %v969 = vld [vmem:[#allocation10 + $0x2c] sm:$0xf]
        %v970 = vld [vmem:[#allocation10 + $0x30] sm:$0xf]
        %v971 = vld [vmem:[#allocation10 + $0x34] sm:$0xf]
        %v972 = vld [vmem:[#allocation10 + $0x38] sm:$0xf]
        %v973 = vld [vmem:[#allocation10 + $0x3c] sm:$0xf]
        %v990 = vunpack.c.l.b16 %v958
        %v991 = vunpack.c.l.b16 %v959
        %v992 = vunpack.c.l.b16 %v960
        %v993 = vunpack.c.l.b16 %v961
        %v994 = vunpack.c.l.b16 %v962
        %v995 = vunpack.c.l.b16 %v963
        %v996 = vunpack.c.l.b16 %v964
        %v997 = vunpack.c.l.b16 %v965
        %v998 = vunpack.c.l.b16 %v966
        %v999 = vunpack.c.l.b16 %v967
        %v1000 = vunpack.c.l.b16 %v968
        %v1001 = vunpack.c.l.b16 %v969
        %v1002 = vunpack.c.l.b16 %v970
        %v1003 = vunpack.c.l.b16 %v971
        %v1004 = vunpack.c.l.b16 %v972
        %v1005 = vunpack.c.l.b16 %v973
        %v1006 = vpack.c.b16 %v991, %v990
        %v1007 = vpack.c.b16 %v993, %v992
        %v1008 = vpack.c.b16 %v995, %v994
        %v1009 = vpack.c.b16 %v997, %v996
        %v1010 = vpack.c.b16 %v999, %v998
        %v1011 = vpack.c.b16 %v1001, %v1000
        %v1012 = vpack.c.b16 %v1003, %v1002
        %v1013 = vpack.c.b16 %v1005, %v1004
        %1022 = vmatprep.subr.bf16.mxu0 0
        %1023 = vmatpush1.bf16.msra.mxu0 %v1013
        %1024 = vmatprep.subr.bf16.mxu0 0
        %1025 = vmatpush1.bf16.msra.mxu0 %v1012
        %1026 = vmatprep.subr.bf16.mxu0 0
        %1027 = vmatpush1.bf16.msra.mxu0 %v1011
        %1028 = vmatprep.subr.bf16.mxu0 0
        %1029 = vmatpush1.bf16.msra.mxu0 %v1010
        %1030 = vmatprep.subr.bf16.mxu0 0
        %1031 = vmatpush1.bf16.msra.mxu0 %v1009
        %1032 = vmatprep.subr.bf16.mxu0 0
        %1033 = vmatpush1.bf16.msra.mxu0 %v1008
        %1034 = vmatprep.subr.bf16.mxu0 0
        %1035 = vmatpush1.bf16.msra.mxu0 %v1007
        %1036 = vmatprep.subr.bf16.mxu0 0
        %1037 = vmatpush1.bf16.msra.mxu0 %v1006
        %1038 = vmatprep.subr.bf16.mxu0 0
        %1039 = vmatpush2.bf16.msra.mxu0 0
        %1040 = vmatprep.subr.bf16.mxu0 0
        %1041 = vmatpush2.bf16.msra.mxu0 0
        %1042 = vmatprep.subr.bf16.mxu0 0
        %1043 = vmatpush2.bf16.msra.mxu0 0
        %1044 = vmatprep.subr.bf16.mxu0 0
        %1045 = vmatpush2.bf16.msra.mxu0 0
        %1046 = vmatprep.subr.bf16.mxu0 0
        %1047 = vmatpush2.bf16.msra.mxu0 0
        %1048 = vmatprep.subr.bf16.mxu0 0
        %1049 = vmatpush2.bf16.msra.mxu0 0
        %1050 = vmatprep.subr.bf16.mxu0 0
        %1051 = vmatpush2.bf16.msra.mxu0 0
        %1052 = vmatprep.subr.bf16.mxu0 0
        %1053 = vmatpush2.bf16.msra.mxu0 0
        %1054 = vmatprep.mubr.bf16.mxu0 0
        %1055 = vmatmul.mubr.bf16.gmra.mxu0 %v957
        %v1056 = vpop.f32.mrf.mxu0
        %v1057 = vadd.f32 0.0, %v1056
        %v1058 = vpop.f32.mrf.mxu0
        %v1059 = vpop.f32.mrf.mxu0
        %v1060 = vadd.f32 0.0, %v1059
        %v1061 = vpop.f32.mrf.mxu0
        %1062 = vdwg.mxu0
        %v1063 = vpack.c.bf16 %v1060, %v1057
        %v1065 = vunpack.c.l.b16 %v1063
        %v1066 = vunpack.c.h.b16 %v1063
        %v1067 = vpack.c.b16 %v1065, %v1065
        %v1068 = vpack.c.b16 %v1066, %v1066
        %1071 = vst [vmem:[%s381] sm:$0xf] %v1067
        %1072 = vst [vmem:[%s381 + $0x4] sm:$0xf] %v1068
        %s1073 = sand.u32 %s208, 1
        %s1074 = scalar_lea.sflag [#allocation4], %s1073
        %s1075 = sand.u32 %s208, 1
        %s1076 = smul.addr %s1075, 8
        %s1077 = scalar_lea.vmem [#allocation11], %s1076
        // Predicated region
        $region73: #{tpu_custom_call.1} parent=51 // pred_check
          %p1078 = pneg %p218
        $region74: #{tpu_custom_call.1} parent=51 // pred_check_branch
          %1080 = sbr.rel (%p1078) target = $region76
        $region75: #{tpu_custom_call.1} parent=51 // pred_region
          %s1081 = smul.u32 2, %s27
          %s1083 = ssub.s32 128, 128
          %1084 = vsyncadd %s1074, %s1083
          %s1085 = smul.addr %s1081, 64
          %s1086 = scalar_lea.hbm %s8, %s1085
          %s1087 = sshll.u32 %s1077, 4
          %s1088 = int_to_ptr.vmem [resolvable:$true] %s1087
          %1093 = dma.vmem_to_hbm [thread:$0]  %s1088, 128, %s1086, %s1074, 64, 64, 4
        $region76: #{tpu_custom_call.1} parent=51 // pred_fallthru
          _
      $region52: #{tpu_custom_call.1} parent=5 // pred_fallthru
        _
      %p1094 = scmp.le.s32.totalorder 2, %s22
      // Predicated region
      $region77: #{tpu_custom_call.1} parent=5 // pred_check
        %p1095 = pneg %p1094
      $region78: #{tpu_custom_call.1} parent=5 // pred_check_branch
        %1097 = sbr.rel (%p1095) target = $region80
      $region79: #{tpu_custom_call.1} parent=5 // pred_region
        %s1098 = ssub.s32 %s22, 2
        // Predicated region
        $region81: #{tpu_custom_call.1} parent=79 // pred_check
          %p1099 = pneg %p224
        $region82: #{tpu_custom_call.1} parent=79 // pred_check_branch
          %1101 = sbr.rel (%p1099) target = $region84
        $region83: #{tpu_custom_call.1} parent=79 // pred_region
          %s1102 = sand.u32 %s209, 1
          %s1103 = scalar_lea.sflag [#allocation4], %s1102
          %s1104 = sand.u32 %s209, 1
          %s1105 = smul.addr %s1104, 8
          %s1106 = scalar_lea.vmem [#allocation11], %s1105
          %1107 = dma.done %s1103, 128
        $region84: #{tpu_custom_call.1} parent=79 // pred_fallthru
          _
      $region80: #{tpu_custom_call.1} parent=5 // pred_fallthru
        _
    $region6: #{tpu_custom_call.1} parent=1 // loop_footer
      %s26 = sadd.s32 1, %s22
    $region7: #{tpu_custom_call.1} parent=1 // loop_footer_branch
      %21 = sbr.rel target = $region3
    $region8: #{tpu_custom_call.1} parent=1 // loop_exit
      _
    %1108 = vsyncpa [#allocation3], 1
    %s1109 = scalar_lea.sflag [#allocation3], 1
    %1110 = vsyncpa %s1109, 1
    %1111 = vsyncpa [#allocation6], 1
    %1112 = vsyncpa [#allocation9], 1
    %1113 = vsyncpa [#allocation4], 1
    %s1114 = scalar_lea.sflag [#allocation4], 1
    %1115 = vsyncpa %s1114, 1

</llo_original>
